<compile_context>
chip_gen: v7x
topology: tpu7x:2x2x1
jax: 0.10.0
libtpu: 0.0.40
codegen_flags: <defaults>
</compile_context>

<pallas_src>
import jax
import jax.numpy as jnp
from jax.experimental import pallas as pl
from jax.experimental.pallas import tpu as pltpu


def _round_up(x, m):
    return (x + m - 1) // m * m


def _num_tensorcores():
    """2 for v7x-class chips (dual TensorCore), else 1. Fail-safe default 1."""
    try:
        kind = getattr(jax.devices()[0], "device_kind", "") or ""
        if "v7" in kind.lower():
            return 2
    except Exception:
        pass
    return 1


def _critic_kernel(x_ref, w1_ref, b1_ref, w2_ref, b2_ref, w3_ref, b3_ref, o_ref):
    # x_ref:  [bm, obs+act] bf16      w1: [obs+act, H] bf16
    # b1/b2:  [1, H] f32              w2: [H, H]       bf16
    # w3:     [1, H] f32              b3: [1]          f32 (SMEM scalar)
    # o_ref:  [bm, 1] f32

    # Layer 1: single fused bf16 MXU matmul (concat done in the wrapper),
    # f32 accumulation, f32 bias + ReLU on the VPU.
    h1 = jnp.dot(x_ref[...], w1_ref[...],
                 preferred_element_type=jnp.float32) + b1_ref[...]
    h1 = jnp.maximum(h1, 0.0)

    # Layer 2: bf16 MXU matmul (K = N = 256), f32 accumulation, f32 bias/ReLU.
    h2 = jnp.dot(h1.astype(jnp.bfloat16), w2_ref[...],
                 preferred_element_type=jnp.float32) + b2_ref[...]
    h2 = jnp.maximum(h2, 0.0)

    # Layer 3 ([256, 1] projection): VPU multiply + XLU cross-lane reduce in
    # f32 (keeps the MXU free of a 1/256-utilization matmul). b3 from SMEM.
    q = jnp.sum(h2 * w3_ref[...], axis=-1, keepdims=True) + b3_ref[0]
    o_ref[...] = q.astype(o_ref.dtype)


def critic_forward(state, action, params, *, block_m=None):
    """Pallas implementation of Critic.forward(state, action) -> [B, 1] f32."""
    w1, b1, w2, b2, w3, b3 = params
    B, obs_dim = state.shape
    act_dim = action.shape[1]
    d_in = obs_dim + act_dim
    H = w1.shape[1]

    # ---- batch tiling -------------------------------------------------------
    if block_m is None:
        # Single grid step on single-TC chips (v5e/v6e); 2-way split only when
        # a dual-TensorCore (v7x) device is detected so the "parallel" axis
        # can shard across cores.  Rows a multiple of 16 (bf16 sublane
        # packing); VMEM is never the constraint here (<2 MiB resident).
        ntc = _num_tensorcores()
        per_core = pl.cdiv(B, ntc)
        block_m = min(1024, max(16, _round_up(per_core, 16)))
    assert block_m % 16 == 0, "block_m must be a multiple of 16 (bf16 packing)"

    B_pad = _round_up(B, block_m)
    grid = (B_pad // block_m,)

    # ---- input prep: fused concat, bf16 matmul path ------------------------
    x = jnp.concatenate([state, action], axis=-1).astype(jnp.bfloat16)  # [B, d_in]
    if B_pad != B:
        x = jnp.pad(x, ((0, B_pad - B), (0, 0)))

    # ---- parameter prep (bf16 matmuls, f32 bias / final projection) --------
    w1_bf = w1.astype(jnp.bfloat16)                   # [d_in, H]
    w2_bf = w2.astype(jnp.bfloat16)                   # [H, H]
    b1_2d = b1.reshape(1, H).astype(jnp.float32)
    b2_2d = b2.reshape(1, H).astype(jnp.float32)
    w3_row = w3.reshape(1, H).astype(jnp.float32)     # transposed final proj
    b3_s = b3.reshape(1).astype(jnp.float32)          # scalar via SMEM

    resident = lambda shape: pl.BlockSpec(shape, lambda i: (0, 0))

    out = pl.pallas_call(
        _critic_kernel,
        out_shape=jax.ShapeDtypeStruct((B_pad, 1), jnp.float32),
        grid_spec=pltpu.PrefetchScalarGridSpec(
            num_scalar_prefetch=0,
            grid=grid,
            in_specs=[
                pl.BlockSpec((block_m, d_in), lambda i: (i, 0)),     # x = [state|action]
                resident((d_in, H)),                                  # w1
                resident((1, H)),                                     # b1
                resident((H, H)),                                     # w2
                resident((1, H)),                                     # b2
                resident((1, H)),                                     # w3 (row)
                pl.BlockSpec(memory_space=pltpu.MemorySpace.SMEM),    # b3
            ],
            # Output stays [block_m, 1]: total writeback is B*4 bytes, so the
            # masked partial store is negligible vs. relayout after the
            # cross-lane reduce.
            out_specs=pl.BlockSpec((block_m, 1), lambda i: (i, 0)),
        ),
        compiler_params=pltpu.CompilerParams(
            dimension_semantics=("parallel",),
        ),
    )(x, w1_bf, b1_2d, w2_bf, b2_2d, w3_row, b3_s)

    return out[:B]


def init_critic_params(key, obs_dim, act_dim, hidden=256):
    """Deterministic init matching PyTorch nn.Linear default (U[-1/sqrt(fan_in), +])."""
    d_in = obs_dim + act_dim
    ks = jax.random.split(key, 6)

    def lin(kw, kb, fan_in, fan_out):
        bound = 1.0 / jnp.sqrt(fan_in)
        w = jax.random.uniform(kw, (fan_in, fan_out), jnp.float32, -bound, bound)
        b = jax.random.uniform(kb, (fan_out,), jnp.float32, -bound, bound)
        return w, b

    w1, b1 = lin(ks[0], ks[1], d_in, hidden)
    w2, b2 = lin(ks[2], ks[3], hidden, hidden)
    w3, b3 = lin(ks[4], ks[5], hidden, 1)
    return (w1, b1, w2, b2, w3, b3)


def critic_ref(state, action, params):
    """Pure-JAX f32 reference (mirrors the PyTorch forward)."""
    w1, b1, w2, b2, w3, b3 = params
    x = jnp.concatenate([state, action], axis=-1)
    h = jax.nn.relu(x @ w1 + b1)
    h = jax.nn.relu(h @ w2 + b2)
    return h @ w3 + b3


if __name__ == "__main__":
    obs_dim, act_dim, batch = 17, 6, 8

    key = jax.random.PRNGKey(0)
    k_state, k_action, k_params = jax.random.split(key, 3)

    state = jax.random.normal(k_state, (batch, obs_dim), jnp.float32)
    action = jax.random.normal(k_action, (batch, act_dim), jnp.float32)
    params = init_critic_params(k_params, obs_dim, act_dim)

    q = jax.block_until_ready(critic_forward(state, action, params))
    q_ref = critic_ref(state, action, params)

    assert q.shape == (batch, 1), q.shape
    # bf16 matmul path with f32 accumulation: relax tolerance vs. the f32 ref.
    assert jnp.allclose(q, q_ref, atol=5e-2, rtol=5e-2), (q, q_ref)

    print("KERNEL_OK")
</pallas_src>

<mosaic_0001>
module attributes {stable_mosaic.version = 11 : i64} {
  func.func @_critic_kernel(%arg0: i32, %arg1: memref<16x23xbf16, #tpu.memory_space<vmem>>, %arg2: memref<23x256xbf16, #tpu.memory_space<vmem>>, %arg3: memref<1x256xf32, #tpu.memory_space<vmem>>, %arg4: memref<256x256xbf16, #tpu.memory_space<vmem>>, %arg5: memref<1x256xf32, #tpu.memory_space<vmem>>, %arg6: memref<1x256xf32, #tpu.memory_space<vmem>>, %arg7: memref<1xf32, #tpu.memory_space<smem>>, %arg8: memref<16x1xf32, #tpu.memory_space<vmem>>) attributes {dimension_semantics = [#tpu.dimension_semantics<parallel>], iteration_bounds = array<i64: 1>, scalar_prefetch = 0 : i64, scratch_operands = 0 : i64, tpu.core_type = #tpu.core_type<tc>, window_params = [{transform_indices = @transform_0, window_bounds = array<i64: 16, 23>}, {pipeline_mode = #tpu.pipeline_mode<synchronous>, transform_indices = @transform_1, window_bounds = array<i64: 23, 256>}, {pipeline_mode = #tpu.pipeline_mode<synchronous>, transform_indices = @transform_2, window_bounds = array<i64: 1, 256>}, {pipeline_mode = #tpu.pipeline_mode<synchronous>, transform_indices = @transform_3, window_bounds = array<i64: 256, 256>}, {pipeline_mode = #tpu.pipeline_mode<synchronous>, transform_indices = @transform_4, window_bounds = array<i64: 1, 256>}, {pipeline_mode = #tpu.pipeline_mode<synchronous>, transform_indices = @transform_5, window_bounds = array<i64: 1, 256>}, {transform_indices = @transform_6, window_bounds = array<i64: 1>}, {transform_indices = @transform_7, window_bounds = array<i64: 16, 1>}]} {
    %c0 = arith.constant 0 : index
    %c0_0 = arith.constant 0 : index
    %0 = vector.load %arg1[%c0, %c0_0] : memref<16x23xbf16, #tpu.memory_space<vmem>>, vector<16x23xbf16>
    %c0_1 = arith.constant 0 : index
    %c0_2 = arith.constant 0 : index
    %1 = vector.load %arg2[%c0_1, %c0_2] : memref<23x256xbf16, #tpu.memory_space<vmem>>, vector<23x256xbf16>
    %cst = arith.constant dense<0.000000e+00> : vector<16x256xf32>
    %2 = tpu.matmul %0, %1, %cst {dimension_numbers = #tpu.dot_dimension_numbers<[1], [0], [0], [1], [0, 0, 1, 1], [], []>} : vector<16x23xbf16>, vector<23x256xbf16>, vector<16x256xf32> -> vector<16x256xf32>
    %c0_3 = arith.constant 0 : index
    %c0_4 = arith.constant 0 : index
    %3 = vector.load %arg3[%c0_3, %c0_4] : memref<1x256xf32, #tpu.memory_space<vmem>>, vector<1x256xf32>
    %4 = vector.broadcast %3 : vector<1x256xf32> to vector<16x256xf32>
    %5 = arith.addf %2, %4 : vector<16x256xf32>
    %cst_5 = arith.constant 0.000000e+00 : f32
    %6 = vector.broadcast %cst_5 : f32 to vector<16x256xf32>
    %7 = arith.maximumf %5, %6 : vector<16x256xf32>
    %8 = arith.truncf %7 : vector<16x256xf32> to vector<16x256xbf16>
    %c0_6 = arith.constant 0 : index
    %c0_7 = arith.constant 0 : index
    %9 = vector.load %arg4[%c0_6, %c0_7] : memref<256x256xbf16, #tpu.memory_space<vmem>>, vector<256x256xbf16>
    %cst_8 = arith.constant dense<0.000000e+00> : vector<16x256xf32>
    %10 = tpu.matmul %8, %9, %cst_8 {dimension_numbers = #tpu.dot_dimension_numbers<[1], [0], [0], [1], [0, 0, 1, 1], [], []>} : vector<16x256xbf16>, vector<256x256xbf16>, vector<16x256xf32> -> vector<16x256xf32>
    %c0_9 = arith.constant 0 : index
    %c0_10 = arith.constant 0 : index
    %11 = vector.load %arg5[%c0_9, %c0_10] : memref<1x256xf32, #tpu.memory_space<vmem>>, vector<1x256xf32>
    %12 = vector.broadcast %11 : vector<1x256xf32> to vector<16x256xf32>
    %13 = arith.addf %10, %12 : vector<16x256xf32>
    %cst_11 = arith.constant 0.000000e+00 : f32
    %14 = vector.broadcast %cst_11 : f32 to vector<16x256xf32>
    %15 = arith.maximumf %13, %14 : vector<16x256xf32>
    %c0_12 = arith.constant 0 : index
    %c0_13 = arith.constant 0 : index
    %16 = vector.load %arg6[%c0_12, %c0_13] : memref<1x256xf32, #tpu.memory_space<vmem>>, vector<1x256xf32>
    %17 = vector.broadcast %16 : vector<1x256xf32> to vector<16x256xf32>
    %18 = arith.mulf %15, %17 : vector<16x256xf32>
    %cst_14 = arith.constant dense<0.000000e+00> : vector<16xf32>
    %19 = vector.multi_reduction <add>, %18, %cst_14 [1] : vector<16x256xf32> to vector<16xf32>
    %20 = vector.shape_cast %19 : vector<16xf32> to vector<16x1xf32>
    %c0_15 = arith.constant 0 : index
    %21 = memref.load %arg7[%c0_15] : memref<1xf32, #tpu.memory_space<smem>>
    %22 = vector.broadcast %21 : f32 to vector<16x1xf32>
    %23 = arith.addf %20, %22 : vector<16x1xf32>
    %c0_16 = arith.constant 0 : index
    %c0_17 = arith.constant 0 : index
    %24 = vector.load %arg8[%c0_16, %c0_17] : memref<16x1xf32, #tpu.memory_space<vmem>>, vector<16x1xf32>
    tpu.vector_store %arg8[%c0_16, %c0_17], %23 {strides = array<i32>} : memref<16x1xf32, #tpu.memory_space<vmem>>, vector<16x1xf32>,
    return
  }
  func.func @transform_0(%arg0: i32) -> (i32, i32) {
    %c0_i32 = arith.constant 0 : i32
    %c0_i32_0 = arith.constant 0 : i32
    return %arg0, %c0_i32 : i32, i32
  }
  func.func @transform_1(%arg0: i32) -> (i32, i32) {
    %c0_i32 = arith.constant 0 : i32
    %c0_i32_0 = arith.constant 0 : i32
    %c0_i32_1 = arith.constant 0 : i32
    return %c0_i32, %c0_i32_0 : i32, i32
  }
  func.func @transform_2(%arg0: i32) -> (i32, i32) {
    %c0_i32 = arith.constant 0 : i32
    %c0_i32_0 = arith.constant 0 : i32
    %c0_i32_1 = arith.constant 0 : i32
    return %c0_i32, %c0_i32_0 : i32, i32
  }
  func.func @transform_3(%arg0: i32) -> (i32, i32) {
    %c0_i32 = arith.constant 0 : i32
    %c0_i32_0 = arith.constant 0 : i32
    %c0_i32_1 = arith.constant 0 : i32
    return %c0_i32, %c0_i32_0 : i32, i32
  }
  func.func @transform_4(%arg0: i32) -> (i32, i32) {
    %c0_i32 = arith.constant 0 : i32
    %c0_i32_0 = arith.constant 0 : i32
    %c0_i32_1 = arith.constant 0 : i32
    return %c0_i32, %c0_i32_0 : i32, i32
  }
  func.func @transform_5(%arg0: i32) -> (i32, i32) {
    %c0_i32 = arith.constant 0 : i32
    %c0_i32_0 = arith.constant 0 : i32
    %c0_i32_1 = arith.constant 0 : i32
    return %c0_i32, %c0_i32_0 : i32, i32
  }
  func.func @transform_6(%arg0: i32) -> i32 {
    %c0_i32 = arith.constant 0 : i32
    %c0_i32_0 = arith.constant 0 : i32
    return %c0_i32 : i32
  }
  func.func @transform_7(%arg0: i32) -> (i32, i32) {
    %c0_i32 = arith.constant 0 : i32
    %c0_i32_0 = arith.constant 0 : i32
    return %arg0, %c0_i32 : i32, i32
  }
}

</mosaic_0001>

<llo_original>
// kernel: tpu_custom_call.1
$region0: #{tpu_custom_call.1}
  #allocation0 [shape = 'u32[]', space=smem, size = 0x4, offset = 0x4, fixed_abs, tag = 'smem constant byte address 0x4 - core index']
  #allocation1 [shape = 'u32[144,128]{1,0:T(1,128)}', space=vmem, size = 0x12000, scoped, tag = 'internal scratch']
  #allocation2 [shape = 'f32[1]{0:T(128)S(6)}', space=smem, size = 0x200, scoped, tag = 'scoped memory for tpu_custom_call.1']
  %s0 = inlined_call_operand.hbm [shape: bf16[16,23], index: 0, kind: input, shape index: {}]
  %s1 = inlined_call_operand.hbm [shape: bf16[23,256], index: 1, kind: input, shape index: {}]
  %s2 = inlined_call_operand.vmem [shape: f32[1,256], index: 2, kind: input, shape index: {}]
  %s3 = inlined_call_operand.hbm [shape: bf16[256,256], index: 3, kind: input, shape index: {}]
  %s4 = inlined_call_operand.vmem [shape: f32[1,256], index: 4, kind: input, shape index: {}]
  %s5 = inlined_call_operand.vmem [shape: f32[1,256], index: 5, kind: input, shape index: {}]
  %s6 = inlined_call_operand.<no memory space> [shape: f32[1], index: 6, kind: input, shape index: {}]
  %s7 = inlined_call_operand.vmem [shape: f32[16,1], index: 7, kind: output, shape index: {}]
  %s8 = sld [smem:[#allocation0]]
  $region50: #{tpu_custom_call.1} parent=0
    _
  %s10 = ssub.s32 1, %s8
  %s11 = scalar_select 0, %s10, %s8
  %12 = sst [smem:[#allocation2]] %s6
  $region1: #{tpu_custom_call.1} parent=0
    #allocation3 [shape = 'u8[4096]{0}', space=vmem, size = 0x1000, scoped, tag = 'input window, operand 0, single buffered']
    #allocation4 [shape = 's32[1]{0}', space=sflag, size = 0x4, scoped, tag = 'scoped memory for tpu_custom_call.1']
    #allocation5 [shape = 'u8[12288]{0}', space=vmem, size = 0x3000, scoped, tag = 'input window, operand 1, single buffered']
    #allocation6 [shape = 's32[1]{0}', space=sflag, size = 0x4, scoped, tag = 'scoped memory for tpu_custom_call.1']
    #allocation7 [shape = 'u8[131072]{0}', space=vmem, size = 0x20000, scoped, tag = 'input window, operand 3, single buffered']
    %13 = vsyncpa [#allocation4], 0
    %14 = vsyncpa [#allocation6], 0
    // Predicated region
    $region2: #{tpu_custom_call.1} parent=1 // pred_check
      _
    $region3: #{tpu_custom_call.1} parent=1 // pred_check_branch
      %16 = sbr.rel (0) target = $region5
    $region4: #{tpu_custom_call.1} parent=1 // pred_region
      %s18 = ssub.s32 128, 128
      %19 = vsyncadd [#allocation4], %s18
      %s20 = sshll.u32 [#allocation3], 4
      %s21 = int_to_ptr.vmem [resolvable:$true] %s20
      %26 = dma.hbm_to_vmem [thread:$0]  %s0, 128, %s21, [#allocation4], 64, 64, 4
    $region5: #{tpu_custom_call.1} parent=1 // pred_fallthru
      _
    // Predicated region
    $region6: #{tpu_custom_call.1} parent=1 // pred_check
      _
    $region7: #{tpu_custom_call.1} parent=1 // pred_check_branch
      %28 = sbr.rel (0) target = $region9
    $region8: #{tpu_custom_call.1} parent=1 // pred_region
      %s30 = ssub.s32 384, 384
      %31 = vsyncadd [#allocation6], %s30
      %s32 = sshll.u32 [#allocation5], 4
      %s33 = int_to_ptr.vmem [resolvable:$true] %s32
      %38 = dma.hbm_to_vmem [thread:$0]  %s1, 384, %s33, [#allocation6], 128, 128, 8
    $region9: #{tpu_custom_call.1} parent=1 // pred_fallthru
      _
    // Predicated region
    $region10: #{tpu_custom_call.1} parent=1 // pred_check
      _
    $region11: #{tpu_custom_call.1} parent=1 // pred_check_branch
      %40 = sbr.rel (0) target = $region13
    $region12: #{tpu_custom_call.1} parent=1 // pred_region
      _
    $region13: #{tpu_custom_call.1} parent=1 // pred_fallthru
      _
    // Predicated region
    $region14: #{tpu_custom_call.1} parent=1 // pred_check
      _
    $region15: #{tpu_custom_call.1} parent=1 // pred_check_branch
      %42 = sbr.rel (0) target = $region17
    $region16: #{tpu_custom_call.1} parent=1 // pred_region
      %s44 = ssub.s32 4096, 4096
      %45 = vsyncadd [#allocation6], %s44
      %s46 = sshll.u32 [#allocation7], 4
      %s47 = int_to_ptr.vmem [resolvable:$true] %s46
      %52 = dma.hbm_to_vmem [thread:$0]  %s3, 4096, %s47, [#allocation6], 128, 128, 8
    $region17: #{tpu_custom_call.1} parent=1 // pred_fallthru
      _
    // Predicated region
    $region18: #{tpu_custom_call.1} parent=1 // pred_check
      _
    $region19: #{tpu_custom_call.1} parent=1 // pred_check_branch
      %54 = sbr.rel (0) target = $region21
    $region20: #{tpu_custom_call.1} parent=1 // pred_region
      _
    $region21: #{tpu_custom_call.1} parent=1 // pred_fallthru
      _
    // Predicated region
    $region22: #{tpu_custom_call.1} parent=1 // pred_check
      _
    $region23: #{tpu_custom_call.1} parent=1 // pred_check_branch
      %56 = sbr.rel (0) target = $region25
    $region24: #{tpu_custom_call.1} parent=1 // pred_region
      _
    $region25: #{tpu_custom_call.1} parent=1 // pred_fallthru
      _
    // Predicated region
    $region26: #{tpu_custom_call.1} parent=1 // pred_check
      _
    $region27: #{tpu_custom_call.1} parent=1 // pred_check_branch
      %58 = sbr.rel (0) target = $region29
    $region28: #{tpu_custom_call.1} parent=1 // pred_region
      _
    $region29: #{tpu_custom_call.1} parent=1 // pred_fallthru
      _
    // Predicated region
    $region30: #{tpu_custom_call.1} parent=1 // pred_check
      _
    $region31: #{tpu_custom_call.1} parent=1 // pred_check_branch
      %60 = sbr.rel (0) target = $region33
    $region32: #{tpu_custom_call.1} parent=1 // pred_region
      %61 = dma.done [#allocation4], 128
    $region33: #{tpu_custom_call.1} parent=1 // pred_fallthru
      _
    // Predicated region
    $region34: #{tpu_custom_call.1} parent=1 // pred_check
      _
    $region35: #{tpu_custom_call.1} parent=1 // pred_check_branch
      %63 = sbr.rel (0) target = $region37
    $region36: #{tpu_custom_call.1} parent=1 // pred_region
      %64 = dma.done [#allocation6], 384
    $region37: #{tpu_custom_call.1} parent=1 // pred_fallthru
      _
    // Predicated region
    $region38: #{tpu_custom_call.1} parent=1 // pred_check
      _
    $region39: #{tpu_custom_call.1} parent=1 // pred_check_branch
      %66 = sbr.rel (0) target = $region41
    $region40: #{tpu_custom_call.1} parent=1 // pred_region
      %67 = dma.done [#allocation6], 4096
    $region41: #{tpu_custom_call.1} parent=1 // pred_fallthru
      _
    %v69 = vld [vmem:[#allocation3] sm:$0xf]
    %v70 = vld [vmem:[#allocation3 + $0x4] sm:$0xf]
    %v71 = vld [vmem:[#allocation5] sm:$0xff]
    %v72 = vld [vmem:[#allocation5 + $0x8] sm:$0xff]
    %v73 = vld [vmem:[#allocation5 + $0x10] sm:$0xff]
    %v74 = vld [vmem:[%s2] sm:$0x3]
    %v76 = vlaneseq
    %v77 = vshrl.u32 %v76, 7
    %v78 = vsub.s32 0, %v77
    %v79 = vrot.slane %v74, %v78
    %v80 = vlaneseq
    %v81 = vshrl.u32 %v80, 7
    %v82 = vsub.s32 1, %v81
    %v83 = vrot.slane %v74, %v82
    %v88 = vunpack.c.l.b16 %v69
    %v89 = vunpack.c.l.b16 %v70
    %v90 = vpack.c.b16 %v89, %v88
    %v94 = vunpack.c.l.b16 %v71
    %v95 = vunpack.c.h.b16 %v71
    %v96 = vunpack.c.l.b16 %v72
    %v97 = vunpack.c.h.b16 %v72
    %v98 = vunpack.c.l.b16 %v73
    %v99 = vunpack.c.h.b16 %v73
    %v100 = vpack.c.b16 %v96, %v94
    %v101 = vpack.c.b16 %v97, %v95
    %v102 = vpack.c.b16 %v98, %v98
    %v103 = vpack.c.b16 %v99, %v99
    %vm106 = vcmask 187392
    %v108 = vsel %vm106, %v90, 0
    %vm110 = vcmask 1042432
    %vm111 = vcmask 1043456
    %v112 = vsel %vm110, 4294967295, 65535
    %v113 = vsel %vm111, %v112, 0
    %v115 = vand.u32 %v102, %v113
    %v118 = vand.u32 %v103, %v113
    %120 = vmatprep.subr.bf16.mxu0 %v101
    %121 = vmatpush1.bf16.msra.mxu0 %v100
    %122 = vmatprep.subr.bf16.mxu0 %v118
    %123 = vmatpush1.bf16.msra.mxu0 %v115
    %124 = vmatprep.subr.bf16.mxu0 0
    %125 = vmatpush1.bf16.msra.mxu0 0
    %126 = vmatprep.subr.bf16.mxu0 0
    %127 = vmatpush1.bf16.msra.mxu0 0
    %128 = vmatprep.subr.bf16.mxu0 0
    %129 = vmatpush1.bf16.msra.mxu0 0
    %130 = vmatprep.subr.bf16.mxu0 0
    %131 = vmatpush1.bf16.msra.mxu0 0
    %132 = vmatprep.subr.bf16.mxu0 0
    %133 = vmatpush1.bf16.msra.mxu0 0
    %134 = vmatprep.subr.bf16.mxu0 0
    %135 = vmatpush1.bf16.msra.mxu0 0
    %136 = vmatprep.subr.bf16.mxu0 0
    %137 = vmatpush1.bf16.msra.mxu0 0
    %138 = vmatprep.subr.bf16.mxu0 0
    %139 = vmatpush1.bf16.msra.mxu0 0
    %140 = vmatprep.subr.bf16.mxu0 0
    %141 = vmatpush1.bf16.msra.mxu0 0
    %142 = vmatprep.subr.bf16.mxu0 0
    %143 = vmatpush1.bf16.msra.mxu0 0
    %144 = vmatprep.subr.bf16.mxu0 0
    %145 = vmatpush1.bf16.msra.mxu0 0
    %146 = vmatprep.subr.bf16.mxu0 0
    %147 = vmatpush1.bf16.msra.mxu0 0
    %148 = vmatprep.subr.bf16.mxu0 0
    %149 = vmatpush1.bf16.msra.mxu0 0
    %150 = vmatprep.subr.bf16.mxu0 0
    %151 = vmatpush1.bf16.msra.mxu0 0
    %152 = vmatprep.mubr.bf16.mxu0 0
    %153 = vmatmul.mubr.bf16.gmra.mrb[0].mxu0 %v108
    %v154 = vpop.f32.mrb[0].mxu0
    %v155 = vadd.f32 %v79, %v154
    %v156 = vpop.f32.mrb[0].mxu0
    %v157 = vadd.f32 %v83, %v156
    %v158 = vpop.f32.mrb[0].mxu0
    %v159 = vadd.f32 %v79, %v158
    %v160 = vpop.f32.mrb[0].mxu0
    %v161 = vadd.f32 %v83, %v160
    %162 = vdwg.mxu0
    %v163 = vmax.f32 %v155, 0.0
    %v164 = vmax.f32 %v157, 0.0
    %v165 = vmax.f32 %v159, 0.0
    %v166 = vmax.f32 %v161, 0.0
    %v167 = vpack.c.bf16 %v165, %v163
    %v168 = vpack.c.bf16 %v166, %v164
    %v169 = vld [vmem:[#allocation7] sm:$0xff]
    %v170 = vld [vmem:[#allocation7 + $0x8] sm:$0xff]
    %v171 = vld [vmem:[#allocation7 + $0x10] sm:$0xff]
    %v172 = vld [vmem:[#allocation7 + $0x18] sm:$0xff]
    %v173 = vld [vmem:[#allocation7 + $0x20] sm:$0xff]
    %v174 = vld [vmem:[#allocation7 + $0x28] sm:$0xff]
    %v175 = vld [vmem:[#allocation7 + $0x30] sm:$0xff]
    %v176 = vld [vmem:[#allocation7 + $0x38] sm:$0xff]
    %v177 = vld [vmem:[#allocation7 + $0x40] sm:$0xff]
    %v178 = vld [vmem:[#allocation7 + $0x48] sm:$0xff]
    %v179 = vld [vmem:[#allocation7 + $0x50] sm:$0xff]
    %v180 = vld [vmem:[#allocation7 + $0x58] sm:$0xff]
    %v181 = vld [vmem:[#allocation7 + $0x60] sm:$0xff]
    %v182 = vld [vmem:[#allocation7 + $0x68] sm:$0xff]
    %v183 = vld [vmem:[#allocation7 + $0x70] sm:$0xff]
    %v184 = vld [vmem:[#allocation7 + $0x78] sm:$0xff]
    %v185 = vld [vmem:[#allocation7 + $0x80] sm:$0xff]
    %v186 = vld [vmem:[#allocation7 + $0x88] sm:$0xff]
    %v187 = vld [vmem:[#allocation7 + $0x90] sm:$0xff]
    %v188 = vld [vmem:[#allocation7 + $0x98] sm:$0xff]
    %v189 = vld [vmem:[#allocation7 + $0xa0] sm:$0xff]
    %v190 = vld [vmem:[#allocation7 + $0xa8] sm:$0xff]
    %v191 = vld [vmem:[#allocation7 + $0xb0] sm:$0xff]
    %v192 = vld [vmem:[#allocation7 + $0xb8] sm:$0xff]
    %v193 = vld [vmem:[#allocation7 + $0xc0] sm:$0xff]
    %v194 = vld [vmem:[#allocation7 + $0xc8] sm:$0xff]
    %v195 = vld [vmem:[#allocation7 + $0xd0] sm:$0xff]
    %v196 = vld [vmem:[#allocation7 + $0xd8] sm:$0xff]
    %v197 = vld [vmem:[#allocation7 + $0xe0] sm:$0xff]
    %v198 = vld [vmem:[#allocation7 + $0xe8] sm:$0xff]
    %v199 = vld [vmem:[#allocation7 + $0xf0] sm:$0xff]
    %v200 = vld [vmem:[#allocation7 + $0xf8] sm:$0xff]
    %v201 = vld [vmem:[%s4] sm:$0x3]
    %v203 = vlaneseq
    %v204 = vshrl.u32 %v203, 7
    %v205 = vsub.s32 0, %v204
    %v206 = vrot.slane %v201, %v205
    %v207 = vlaneseq
    %v208 = vshrl.u32 %v207, 7
    %v209 = vsub.s32 1, %v208
    %v210 = vrot.slane %v201, %v209
    %v245 = vunpack.c.l.b16 %v169
    %v246 = vunpack.c.h.b16 %v169
    %v247 = vunpack.c.l.b16 %v170
    %v248 = vunpack.c.h.b16 %v170
    %v249 = vunpack.c.l.b16 %v171
    %v250 = vunpack.c.h.b16 %v171
    %v251 = vunpack.c.l.b16 %v172
    %v252 = vunpack.c.h.b16 %v172
    %v253 = vunpack.c.l.b16 %v173
    %v254 = vunpack.c.h.b16 %v173
    %v255 = vunpack.c.l.b16 %v174
    %v256 = vunpack.c.h.b16 %v174
    %v257 = vunpack.c.l.b16 %v175
    %v258 = vunpack.c.h.b16 %v175
    %v259 = vunpack.c.l.b16 %v176
    %v260 = vunpack.c.h.b16 %v176
    %v261 = vunpack.c.l.b16 %v177
    %v262 = vunpack.c.h.b16 %v177
    %v263 = vunpack.c.l.b16 %v178
    %v264 = vunpack.c.h.b16 %v178
    %v265 = vunpack.c.l.b16 %v179
    %v266 = vunpack.c.h.b16 %v179
    %v267 = vunpack.c.l.b16 %v180
    %v268 = vunpack.c.h.b16 %v180
    %v269 = vunpack.c.l.b16 %v181
    %v270 = vunpack.c.h.b16 %v181
    %v271 = vunpack.c.l.b16 %v182
    %v272 = vunpack.c.h.b16 %v182
    %v273 = vunpack.c.l.b16 %v183
    %v274 = vunpack.c.h.b16 %v183
    %v275 = vunpack.c.l.b16 %v184
    %v276 = vunpack.c.h.b16 %v184
    %v277 = vunpack.c.l.b16 %v185
    %v278 = vunpack.c.h.b16 %v185
    %v279 = vunpack.c.l.b16 %v186
    %v280 = vunpack.c.h.b16 %v186
    %v281 = vunpack.c.l.b16 %v187
    %v282 = vunpack.c.h.b16 %v187
    %v283 = vunpack.c.l.b16 %v188
    %v284 = vunpack.c.h.b16 %v188
    %v285 = vunpack.c.l.b16 %v189
    %v286 = vunpack.c.h.b16 %v189
    %v287 = vunpack.c.l.b16 %v190
    %v288 = vunpack.c.h.b16 %v190
    %v289 = vunpack.c.l.b16 %v191
    %v290 = vunpack.c.h.b16 %v191
    %v291 = vunpack.c.l.b16 %v192
    %v292 = vunpack.c.h.b16 %v192
    %v293 = vunpack.c.l.b16 %v193
    %v294 = vunpack.c.h.b16 %v193
    %v295 = vunpack.c.l.b16 %v194
    %v296 = vunpack.c.h.b16 %v194
    %v297 = vunpack.c.l.b16 %v195
    %v298 = vunpack.c.h.b16 %v195
    %v299 = vunpack.c.l.b16 %v196
    %v300 = vunpack.c.h.b16 %v196
    %v301 = vunpack.c.l.b16 %v197
    %v302 = vunpack.c.h.b16 %v197
    %v303 = vunpack.c.l.b16 %v198
    %v304 = vunpack.c.h.b16 %v198
    %v305 = vunpack.c.l.b16 %v199
    %v306 = vunpack.c.h.b16 %v199
    %v307 = vunpack.c.l.b16 %v200
    %v308 = vunpack.c.h.b16 %v200
    %v309 = vpack.c.b16 %v247, %v245
    %v310 = vpack.c.b16 %v248, %v246
    %v311 = vpack.c.b16 %v251, %v249
    %v312 = vpack.c.b16 %v252, %v250
    %v313 = vpack.c.b16 %v255, %v253
    %v314 = vpack.c.b16 %v256, %v254
    %v315 = vpack.c.b16 %v259, %v257
    %v316 = vpack.c.b16 %v260, %v258
    %v317 = vpack.c.b16 %v263, %v261
    %v318 = vpack.c.b16 %v264, %v262
    %v319 = vpack.c.b16 %v267, %v265
    %v320 = vpack.c.b16 %v268, %v266
    %v321 = vpack.c.b16 %v271, %v269
    %v322 = vpack.c.b16 %v272, %v270
    %v323 = vpack.c.b16 %v275, %v273
    %v324 = vpack.c.b16 %v276, %v274
    %v325 = vpack.c.b16 %v279, %v277
    %v326 = vpack.c.b16 %v280, %v278
    %v327 = vpack.c.b16 %v283, %v281
    %v328 = vpack.c.b16 %v284, %v282
    %v329 = vpack.c.b16 %v287, %v285
    %v330 = vpack.c.b16 %v288, %v286
    %v331 = vpack.c.b16 %v291, %v289
    %v332 = vpack.c.b16 %v292, %v290
    %v333 = vpack.c.b16 %v295, %v293
    %v334 = vpack.c.b16 %v296, %v294
    %v335 = vpack.c.b16 %v299, %v297
    %v336 = vpack.c.b16 %v300, %v298
    %v337 = vpack.c.b16 %v303, %v301
    %v338 = vpack.c.b16 %v304, %v302
    %v339 = vpack.c.b16 %v307, %v305
    %v340 = vpack.c.b16 %v308, %v306
    %373 = vmatprep.subr.bf16.mxu0 %v310
    %374 = vmatpush1.bf16.msra.mxu0 %v309
    %375 = vmatprep.subr.bf16.mxu0 %v312
    %376 = vmatpush1.bf16.msra.mxu0 %v311
    %377 = vmatprep.subr.bf16.mxu0 %v314
    %378 = vmatpush1.bf16.msra.mxu0 %v313
    %379 = vmatprep.subr.bf16.mxu0 %v316
    %380 = vmatpush1.bf16.msra.mxu0 %v315
    %381 = vmatprep.subr.bf16.mxu0 %v318
    %382 = vmatpush1.bf16.msra.mxu0 %v317
    %383 = vmatprep.subr.bf16.mxu0 %v320
    %384 = vmatpush1.bf16.msra.mxu0 %v319
    %385 = vmatprep.subr.bf16.mxu0 %v322
    %386 = vmatpush1.bf16.msra.mxu0 %v321
    %387 = vmatprep.subr.bf16.mxu0 %v324
    %388 = vmatpush1.bf16.msra.mxu0 %v323
    %389 = vmatprep.subr.bf16.mxu0 %v326
    %390 = vmatpush1.bf16.msra.mxu0 %v325
    %391 = vmatprep.subr.bf16.mxu0 %v328
    %392 = vmatpush1.bf16.msra.mxu0 %v327
    %393 = vmatprep.subr.bf16.mxu0 %v330
    %394 = vmatpush1.bf16.msra.mxu0 %v329
    %395 = vmatprep.subr.bf16.mxu0 %v332
    %396 = vmatpush1.bf16.msra.mxu0 %v331
    %397 = vmatprep.subr.bf16.mxu0 %v334
    %398 = vmatpush1.bf16.msra.mxu0 %v333
    %399 = vmatprep.subr.bf16.mxu0 %v336
    %400 = vmatpush1.bf16.msra.mxu0 %v335
    %401 = vmatprep.subr.bf16.mxu0 %v338
    %402 = vmatpush1.bf16.msra.mxu0 %v337
    %403 = vmatprep.subr.bf16.mxu0 %v340
    %404 = vmatpush1.bf16.msra.mxu0 %v339
    %405 = vmatprep.mubr.bf16.mxu0 %v168
    %406 = vmatmul.mubr.bf16.gmra.mrb[0].mxu0 %v167
    %v407 = vpop.f32.mrb[0].mxu0
    %v408 = vadd.f32 %v206, %v407
    %v409 = vpop.f32.mrb[0].mxu0
    %v410 = vadd.f32 %v210, %v409
    %v411 = vpop.f32.mrb[0].mxu0
    %v412 = vadd.f32 %v206, %v411
    %v413 = vpop.f32.mrb[0].mxu0
    %v414 = vadd.f32 %v210, %v413
    %415 = vdwg.mxu0
    %v416 = vmax.f32 %v408, 0.0
    %v417 = vmax.f32 %v410, 0.0
    %v418 = vmax.f32 %v412, 0.0
    %v419 = vmax.f32 %v414, 0.0
    %v420 = vld [vmem:[%s5] sm:$0x3]
    %v422 = vlaneseq
    %v423 = vshrl.u32 %v422, 7
    %v424 = vsub.s32 0, %v423
    %v425 = vrot.slane %v420, %v424
    %v426 = vlaneseq
    %v427 = vshrl.u32 %v426, 7
    %v428 = vsub.s32 1, %v427
    %v429 = vrot.slane %v420, %v428
    %v432 = vmul.f32 %v416, %v425
    %v433 = vmul.f32 %v417, %v429
    %v434 = vmul.f32 %v418, %v425
    %v435 = vmul.f32 %v419, %v429
    %v436 = vadd.f32 %v432, %v433
    %437 = vadd.xlane.f32.xlu0 %v436
    %v438 = vpop.xlane.xlu0 %437
    %v439 = vadd.f32 %v434, %v435
    %440 = vadd.xlane.f32.xlu0 %v439
    %v441 = vpop.xlane.xlu0 %440
    %s442 = sld [smem:[#allocation2]]
    %v443 = vstv %s442
    %v444 = vadd.f32 %v438, %v443
    %v445 = vadd.f32 %v441, %v443
    %vm446 = vcmask 7168
    %447 = vst.msk [vmem:[%s7] sm:$0xff] %vm446, %v444
    %448 = vst.msk [vmem:[%s7 + $0x8] sm:$0xff] %vm446, %v445
    // Predicated region
    $region42: #{tpu_custom_call.1} parent=1 // pred_check
      _
    $region43: #{tpu_custom_call.1} parent=1 // pred_check_branch
      %450 = sbr.rel (0) target = $region45
    $region44: #{tpu_custom_call.1} parent=1 // pred_region
      _
    $region45: #{tpu_custom_call.1} parent=1 // pred_fallthru
      _
    // Predicated region
    $region46: #{tpu_custom_call.1} parent=1 // pred_check
      _
    $region47: #{tpu_custom_call.1} parent=1 // pred_check_branch
      %452 = sbr.rel (0) target = $region49
    $region48: #{tpu_custom_call.1} parent=1 // pred_region
      _
    $region49: #{tpu_custom_call.1} parent=1 // pred_fallthru
      _
    %453 = vsyncpa [#allocation4], 1
    %454 = vsyncpa [#allocation6], 1

</llo_original>
